<compile_context>
chip_gen: v5e
topology: v5e:2x2
jax: 0.10.0
libtpu: 0.0.40
codegen_flags: <defaults>
</compile_context>

<pallas_src>
import functools

import jax
import jax.numpy as jnp
from jax.experimental import pallas as pl
from jax.experimental.pallas import tpu as pltpu


def _round_up(n, m):
    return ((n + m - 1) // m) * m


# ----------------------------------------------------------------------------
# Pallas kernel: branch_main = 1x1 conv+BN+SiLU -> KxK depthwise conv+BN ->
#                              1x1 conv+BN+SiLU      (all stride 1)
# In-kernel layout: channels on sublanes, flattened images (whole multiples of
# H*W) on lanes.
# ----------------------------------------------------------------------------
def _shufflenet_branch_kernel(W, K,
                              x_ref, w1_ref, b1_ref, wdw_ref, mask_ref,
                              b2_ref, w3_ref, b3_ref, out_ref):
    P = K // 2
    lanes = x_ref.shape[-1]          # images_per_step * H * W
    Cpad = w1_ref.shape[0]           # mid channels, padded to a sublane tile

    def silu(y):
        # exp + reciprocal both run on the (otherwise idle) EUP slot.
        return y * pl.reciprocal(1.0 + jnp.exp(-y), approx=True)

    x = x_ref[...]                                           # (Cin, lanes)

    # --- 1x1 conv (inp -> mid); BN scale pre-folded into w1; bias + SiLU ----
    y1 = jnp.dot(w1_ref[...], x, preferred_element_type=jnp.float32)
    y1 = silu(y1 + b1_ref[...])                              # (Cpad, lanes) f32

    # --- KxK depthwise conv (stride 1, pad P); BN folded; no activation -----
    # Spatial index lives on the lane axis; tap (dh, dw) is a lane roll by
    # -(dh*W + dw) (XLU slot) plus a precomputed per-image boundary mask
    # (tiled to the full lane width, so image-boundary / tile-wrap lanes are
    # zeroed).
    acc = jnp.broadcast_to(b2_ref[...], (Cpad, lanes))
    for kh in range(K):
        for kw in range(K):
            idx = kh * K + kw
            off = (kh - P) * W + (kw - P)
            tap = y1 if off == 0 else pltpu.roll(y1, (-off) % lanes, axis=1)
            contrib = tap * wdw_ref[idx]                     # (Cpad, 1) weight
            if off != 0:
                contrib = contrib * mask_ref[idx]            # (1, lanes) 0/1 mask
            acc = acc + contrib
    # TODO(synk): on v6e/v7x this 9-tap chain could run in bf16 (packed vregs).

    # --- 1x1 conv (mid -> out); BN folded; bias + SiLU -----------------------
    y3 = jnp.dot(w3_ref[...], acc.astype(w3_ref.dtype),
                 preferred_element_type=jnp.float32)
    y3 = silu(y3 + b3_ref[...])                              # (Opad, lanes)

    # Full padded-tile store: lane-dense, unmasked vst.  Padded rows are
    # exactly zero and are sliced off in the wrapper.
    out_ref[...] = y3.astype(out_ref.dtype)


def _pick_images_per_step(num_images, hw, cin, cpad, opad, kk, itemsize,
                          target_lanes=2048, vmem_budget=8 << 20):
    """Largest divisor of num_images whose lane tile hits ~target_lanes and fits
    a conservative (v7x-safe) per-step VMEM budget."""
    def step_bytes(ips):
        lanes = ips * hw
        return (2 * cin * lanes * itemsize        # x (double-buffered)
                + 2 * opad * lanes * 4            # out (double-buffered)
                + kk * 8 * lanes * 4              # boundary masks (sublane-padded)
                + 4 * cpad * lanes * 4)           # y1 / acc / tap temporaries
    ips = max(1, min(num_images, max(1, target_lanes // hw)))
    while ips > 1 and (num_images % ips != 0 or step_bytes(ips) > vmem_budget):
        ips -= 1
    return ips


def shufflenet_branch_main(xf, w1, b1, wdw, b2, w3, b3, *,
                           num_images, H, W, K, operand_dtype=jnp.float32):
    """Branch-main of the ShuffleNet unit (stride=1).

    xf : (Cin, B*H*W) channel-major branch input (lane axis = B*H*W).
    w1 : (Cmid, Cin)   1x1 conv weight with BN scale folded in.
    b1 : (Cmid,)       folded BN bias.
    wdw: (Cmid, K, K)  depthwise weight with BN scale folded in.
    b2 : (Cmid,)       folded BN bias.
    w3 : (Cout, Cmid)  1x1 conv weight with BN scale folded in.
    b3 : (Cout,)       folded BN bias.
    Returns (Opad, B*H*W) float32; rows >= Cout are zero padding.
    """
    Cin, total_lanes = xf.shape
    HW = H * W
    assert total_lanes == num_images * HW, (num_images, H, W, total_lanes)
    Cmid = w1.shape[0]
    Cout = w3.shape[0]
    P = K // 2
    itemsize = jnp.dtype(operand_dtype).itemsize

    # Pad mid/out channel dims to full sublane tiles (8) so lane rolls and both
    # MXU matmuls see (8,128)-aligned operands; padded rows stay exactly zero.
    Cpad = _round_up(Cmid, 8)
    Opad = _round_up(Cout, 8)

    ips = _pick_images_per_step(num_images, HW, Cin, Cpad, Opad, K * K, itemsize)
    lanes = ips * HW
    num_tiles = num_images // ips
    # (For v7x production batches prefer an even num_tiles so both TCs get work.)

    xk = xf.astype(operand_dtype)
    w1p = jnp.pad(w1, ((0, Cpad - Cmid), (0, 0))).astype(operand_dtype)   # (Cpad, Cin)
    b1p = jnp.pad(b1, (0, Cpad - Cmid))[:, None]                          # (Cpad, 1)
    # Depthwise weights: (Cmid,K,K) -> (K*K, Cpad, 1) so wdw_ref[tap] is (Cpad,1).
    wdwp = jnp.pad(wdw, ((0, Cpad - Cmid), (0, 0), (0, 0)))
    wdwp = jnp.transpose(wdwp, (1, 2, 0)).reshape(K * K, Cpad, 1)
    b2p = jnp.pad(b2, (0, Cpad - Cmid))[:, None]                          # (Cpad, 1)
    w3p = jnp.pad(w3, ((0, Opad - Cout), (0, Cpad - Cmid))).astype(operand_dtype)
    b3p = jnp.pad(b3, (0, Opad - Cout))[:, None]                          # (Opad, 1)

    # Per-image 0/1 boundary masks per depthwise tap, tiled to the lane-tile
    # width (whole-image multiples, so cross-image roll wrap is zeroed too).
    hh = jnp.arange(H)[:, None]
    ww = jnp.arange(W)[None, :]
    masks = []
    for kh in range(K):
        for kw in range(K):
            dh, dw = kh - P, kw - P
            valid = ((hh + dh >= 0) & (hh + dh < H) &
                     (ww + dw >= 0) & (ww + dw < W))
            masks.append(valid.reshape(HW))
    m = jnp.stack(masks).astype(jnp.float32)                 # (K*K, HW)
    dwmask = jnp.tile(m, (1, ips))[:, None, :]                # (K*K, 1, lanes)

    kernel = functools.partial(_shufflenet_branch_kernel, W, K)

    grid_spec = pltpu.PrefetchScalarGridSpec(
        num_scalar_prefetch=0,
        grid=(num_tiles,),
        in_specs=[
            pl.BlockSpec((Cin, lanes), lambda t: (0, t)),            # x
            pl.BlockSpec((Cpad, Cin), lambda t: (0, 0)),             # w1*s1
            pl.BlockSpec((Cpad, 1), lambda t: (0, 0)),               # b1
            pl.BlockSpec((K * K, Cpad, 1), lambda t: (0, 0, 0)),     # dw*s2
            pl.BlockSpec((K * K, 1, lanes), lambda t: (0, 0, 0)),    # tap masks
            pl.BlockSpec((Cpad, 1), lambda t: (0, 0)),               # b2
            pl.BlockSpec((Opad, Cpad), lambda t: (0, 0)),            # w3*s3
            pl.BlockSpec((Opad, 1), lambda t: (0, 0)),               # b3
        ],
        out_specs=pl.BlockSpec((Opad, lanes), lambda t: (0, t)),
    )

    cost = pl.CostEstimate(
        flops=2 * total_lanes * (Cin * Cmid + K * K * Cmid + Cmid * Cout),
        transcendentals=2 * total_lanes * (Cmid + Cout),
        bytes_accessed=(itemsize * (Cin * total_lanes + Cpad * Cin + Opad * Cpad)
                        + 4 * (Opad * total_lanes + K * K * lanes
                               + Cpad * (K * K + 2) + Opad)),
    )

    return pl.pallas_call(
        kernel,
        out_shape=jax.ShapeDtypeStruct((Opad, total_lanes), jnp.float32),
        grid_spec=grid_spec,
        compiler_params=pltpu.CompilerParams(
            dimension_semantics=("parallel",)),
        cost_estimate=cost,
    )(xk, w1p, b1p, wdwp, dwmask, b2p, w3p, b3p)


# ----------------------------------------------------------------------------
# Parameter init (deterministic, synthetic) and JAX glue
# ----------------------------------------------------------------------------
def init_params(key, inp, oup, ksize):
    mid = oup // 2                 # base_mid_channels
    outputs = oup - inp
    ks = jax.random.split(key, 6)

    def bn_fold(k, c):
        k1, k2, k3, k4 = jax.random.split(k, 4)
        gamma = jax.random.uniform(k1, (c,), jnp.float32, 0.5, 1.5)
        beta = 0.1 * jax.random.normal(k2, (c,), jnp.float32)
        mean = 0.1 * jax.random.normal(k3, (c,), jnp.float32)
        var = jax.random.uniform(k4, (c,), jnp.float32, 0.5, 1.5)
        scale = gamma / jnp.sqrt(var + 1e-3)                # eps = 0.001
        bias = beta - mean * scale
        return scale, bias

    conv1_w = 0.2 * jax.random.normal(ks[0], (mid, inp), jnp.float32)        # 1x1
    dw_w = 0.2 * jax.random.normal(ks[1], (mid, ksize, ksize), jnp.float32)  # depthwise
    conv3_w = 0.2 * jax.random.normal(ks[2], (outputs, mid), jnp.float32)    # 1x1
    s1, b1 = bn_fold(ks[3], mid)
    s2, b2 = bn_fold(ks[4], mid)
    s3, b3 = bn_fold(ks[5], outputs)
    return dict(conv1_w=conv1_w, dw_w=dw_w, conv3_w=conv3_w,
                s1=s1, b1=b1, s2=s2, b2=b2, s3=s3, b3=b3)


def shufflenet_forward(old_x, params, *, ksize, operand_dtype=jnp.float32):
    """Shufflenet forward (stride=1): channel_shuffle -> branch_main -> concat."""
    B, C, H, W = old_x.shape
    # channel_shuffle: x_proj = even channels, x = odd channels
    x_proj = old_x[:, 0::2]
    x_br = old_x[:, 1::2]
    Cin = x_br.shape[1]
    Cout = params['conv3_w'].shape[0]

    # Channel-major, batch flattened into the lane axis: (Cin, B*H*W).
    # TODO(synk): this slice+transpose and the final concat could be fused into
    # the kernel (input index_map on a (B, C//2, 2, HW) view + aliased concat
    # output) to save the extra HBM passes.
    xf = jnp.transpose(x_br.reshape(B, Cin, H * W), (1, 0, 2)).reshape(Cin, B * H * W)

    # Fold the inference-mode BN scales into the conv weights (once, in XLA, f32).
    w1 = params['conv1_w'] * params['s1'][:, None]           # (Cmid, Cin)
    wdw = params['dw_w'] * params['s2'][:, None, None]       # (Cmid, K, K)
    w3 = params['conv3_w'] * params['s3'][:, None]           # (Cout, Cmid)

    yp = shufflenet_branch_main(xf, w1, params['b1'], wdw, params['b2'],
                                w3, params['b3'],
                                num_images=B, H=H, W=W, K=ksize,
                                operand_dtype=operand_dtype)  # (Opad, B*HW)
    y = yp[:Cout].reshape(Cout, B, H, W).transpose(1, 0, 2, 3)  # drop zero pad rows
    return jnp.concatenate([x_proj, y.astype(old_x.dtype)], axis=1)


# ----------------------------------------------------------------------------
# Pure-JAX reference (for validation)
# ----------------------------------------------------------------------------
def _silu(x):
    return x * jax.nn.sigmoid(x)


def ref_forward(old_x, params, *, ksize):
    B, C, H, W = old_x.shape
    P = ksize // 2
    hp = jax.lax.Precision.HIGHEST
    x_proj = old_x[:, 0::2]
    x = old_x[:, 1::2]

    y = jnp.einsum('oc,bchw->bohw', params['conv1_w'], x, precision=hp)
    y = y * params['s1'][None, :, None, None] + params['b1'][None, :, None, None]
    y = _silu(y)

    yp = jnp.pad(y, ((0, 0), (0, 0), (P, P), (P, P)))
    z = jnp.zeros_like(y)
    for kh in range(ksize):
        for kw in range(ksize):
            wk = params['dw_w'][:, kh, kw][None, :, None, None]
            z = z + yp[:, :, kh:kh + H, kw:kw + W] * wk
    z = z * params['s2'][None, :, None, None] + params['b2'][None, :, None, None]

    u = jnp.einsum('oc,bchw->bohw', params['conv3_w'], z, precision=hp)
    u = _silu(u * params['s3'][None, :, None, None] + params['b3'][None, :, None, None])
    return jnp.concatenate([x_proj, u], axis=1)


# ----------------------------------------------------------------------------
if __name__ == "__main__":
    # Shufflenet(inp=4, oup=8, base_mid_channels=4, ksize=3, stride=1)
    inp, oup, ksize = 4, 8, 3
    B, H, W = 2, 16, 16

    key = jax.random.PRNGKey(0)
    kx, kp = jax.random.split(key)
    old_x = jax.random.normal(kx, (B, 2 * inp, H, W), jnp.float32)
    params = init_params(kp, inp, oup, ksize)
    ref = ref_forward(old_x, params, ksize=ksize)

    # f32 path (default; what v5e should run).
    out = shufflenet_forward(old_x, params, ksize=ksize)
    out = jax.block_until_ready(out)
    assert out.shape == (B, oup, H, W), out.shape
    err = float(jnp.max(jnp.abs(out - ref)))
    assert err < 1e-2, f"f32 path max abs err {err}"

    # bf16 MXU-operand path (v6e/v7x); looser tolerance vs. the f32 reference.
    out_bf16 = jax.block_until_ready(
        shufflenet_forward(old_x, params, ksize=ksize, operand_dtype=jnp.bfloat16))
    err_bf16 = float(jnp.max(jnp.abs(out_bf16 - ref)))
    assert err_bf16 < 1e-1, f"bf16 path max abs err {err_bf16}"

    print("KERNEL_OK")
</pallas_src>

<mosaic_0001>
module attributes {stable_mosaic.version = 11 : i64} {
  func.func @_shufflenet_branch_kernel(%arg0: i32, %arg1: memref<4x512xf32, #tpu.memory_space<vmem>>, %arg2: memref<8x4xf32, #tpu.memory_space<vmem>>, %arg3: memref<8x1xf32, #tpu.memory_space<vmem>>, %arg4: memref<9x8x1xf32, #tpu.memory_space<vmem>>, %arg5: memref<9x1x512xf32, #tpu.memory_space<vmem>>, %arg6: memref<8x1xf32, #tpu.memory_space<vmem>>, %arg7: memref<8x8xf32, #tpu.memory_space<vmem>>, %arg8: memref<8x1xf32, #tpu.memory_space<vmem>>, %arg9: memref<8x512xf32, #tpu.memory_space<vmem>>) attributes {dimension_semantics = [#tpu.dimension_semantics<parallel>], iteration_bounds = array<i64: 1>, scalar_prefetch = 0 : i64, scratch_operands = 0 : i64, tpu.core_type = #tpu.core_type<tc>, window_params = [{transform_indices = @transform_0, window_bounds = array<i64: 4, 512>}, {pipeline_mode = #tpu.pipeline_mode<synchronous>, transform_indices = @transform_1, window_bounds = array<i64: 8, 4>}, {pipeline_mode = #tpu.pipeline_mode<synchronous>, transform_indices = @transform_2, window_bounds = array<i64: 8, 1>}, {pipeline_mode = #tpu.pipeline_mode<synchronous>, transform_indices = @transform_3, window_bounds = array<i64: 9, 8, 1>}, {pipeline_mode = #tpu.pipeline_mode<synchronous>, transform_indices = @transform_4, window_bounds = array<i64: 9, 1, 512>}, {pipeline_mode = #tpu.pipeline_mode<synchronous>, transform_indices = @transform_5, window_bounds = array<i64: 8, 1>}, {pipeline_mode = #tpu.pipeline_mode<synchronous>, transform_indices = @transform_6, window_bounds = array<i64: 8, 8>}, {pipeline_mode = #tpu.pipeline_mode<synchronous>, transform_indices = @transform_7, window_bounds = array<i64: 8, 1>}, {transform_indices = @transform_8, window_bounds = array<i64: 8, 512>}]} {
    %c0 = arith.constant 0 : index
    %c0_0 = arith.constant 0 : index
    %0 = vector.load %arg1[%c0, %c0_0] : memref<4x512xf32, #tpu.memory_space<vmem>>, vector<4x512xf32>
    %c0_1 = arith.constant 0 : index
    %c0_2 = arith.constant 0 : index
    %1 = vector.load %arg2[%c0_1, %c0_2] : memref<8x4xf32, #tpu.memory_space<vmem>>, vector<8x4xf32>
    %cst = arith.constant dense<0.000000e+00> : vector<8x512xf32>
    %2 = tpu.matmul %1, %0, %cst {dimension_numbers = #tpu.dot_dimension_numbers<[1], [0], [0], [1], [0, 0, 1, 1], [], []>} : vector<8x4xf32>, vector<4x512xf32>, vector<8x512xf32> -> vector<8x512xf32>
    %c0_3 = arith.constant 0 : index
    %c0_4 = arith.constant 0 : index
    %3 = vector.load %arg3[%c0_3, %c0_4] : memref<8x1xf32, #tpu.memory_space<vmem>>, vector<8x1xf32>
    %4 = vector.broadcast %3 : vector<8x1xf32> to vector<8x512xf32>
    %5 = arith.addf %2, %4 : vector<8x512xf32>
    %cst_5 = arith.constant 0.000000e+00 : f32
    %6 = vector.broadcast %cst_5 : f32 to vector<8x512xf32>
    %7 = arith.subf %6, %5 : vector<8x512xf32>
    %8 = math.exp %7 : vector<8x512xf32>
    %cst_6 = arith.constant 1.000000e+00 : f32
    %9 = vector.broadcast %cst_6 : f32 to vector<8x512xf32>
    %10 = arith.addf %9, %8 : vector<8x512xf32>
    %11 = tpu.reciprocal %10 {approx = true} : vector<8x512xf32> -> vector<8x512xf32>
    %12 = arith.mulf %5, %11 : vector<8x512xf32>
    %c0_7 = arith.constant 0 : index
    %c0_8 = arith.constant 0 : index
    %13 = vector.load %arg6[%c0_7, %c0_8] : memref<8x1xf32, #tpu.memory_space<vmem>>, vector<8x1xf32>
    %14 = vector.shape_cast %13 : vector<8x1xf32> to vector<8x1xf32>
    %15 = vector.broadcast %14 : vector<8x1xf32> to vector<8x512xf32>
    %c17_i32 = arith.constant 17 : i32
    %16 = tpu.dynamic_rotate %12 by %c17_i32 dim 1 : vector<8x512xf32>, i32 -> vector<8x512xf32>
    %c0_9 = arith.constant 0 : index
    %c0_10 = arith.constant 0 : index
    %c0_11 = arith.constant 0 : index
    %17 = vector.load %arg4[%c0_9, %c0_10, %c0_11] : memref<9x8x1xf32, #tpu.memory_space<vmem>>, vector<1x8x1xf32>
    %18 = vector.shape_cast %17 : vector<1x8x1xf32> to vector<8x1xf32>
    %19 = vector.broadcast %18 : vector<8x1xf32> to vector<8x512xf32>
    %20 = arith.mulf %16, %19 : vector<8x512xf32>
    %c0_12 = arith.constant 0 : index
    %c0_13 = arith.constant 0 : index
    %c0_14 = arith.constant 0 : index
    %21 = vector.load %arg5[%c0_12, %c0_13, %c0_14] : memref<9x1x512xf32, #tpu.memory_space<vmem>>, vector<1x1x512xf32>
    %22 = vector.shape_cast %21 : vector<1x1x512xf32> to vector<1x512xf32>
    %23 = vector.broadcast %22 : vector<1x512xf32> to vector<8x512xf32>
    %24 = arith.mulf %20, %23 : vector<8x512xf32>
    %25 = arith.addf %15, %24 : vector<8x512xf32>
    %c16_i32 = arith.constant 16 : i32
    %26 = tpu.dynamic_rotate %12 by %c16_i32 dim 1 : vector<8x512xf32>, i32 -> vector<8x512xf32>
    %c1 = arith.constant 1 : index
    %c0_15 = arith.constant 0 : index
    %c0_16 = arith.constant 0 : index
    %27 = vector.load %arg4[%c1, %c0_15, %c0_16] : memref<9x8x1xf32, #tpu.memory_space<vmem>>, vector<1x8x1xf32>
    %28 = vector.shape_cast %27 : vector<1x8x1xf32> to vector<8x1xf32>
    %29 = vector.broadcast %28 : vector<8x1xf32> to vector<8x512xf32>
    %30 = arith.mulf %26, %29 : vector<8x512xf32>
    %c1_17 = arith.constant 1 : index
    %c0_18 = arith.constant 0 : index
    %c0_19 = arith.constant 0 : index
    %31 = vector.load %arg5[%c1_17, %c0_18, %c0_19] : memref<9x1x512xf32, #tpu.memory_space<vmem>>, vector<1x1x512xf32>
    %32 = vector.shape_cast %31 : vector<1x1x512xf32> to vector<1x512xf32>
    %33 = vector.broadcast %32 : vector<1x512xf32> to vector<8x512xf32>
    %34 = arith.mulf %30, %33 : vector<8x512xf32>
    %35 = arith.addf %25, %34 : vector<8x512xf32>
    %c15_i32 = arith.constant 15 : i32
    %36 = tpu.dynamic_rotate %12 by %c15_i32 dim 1 : vector<8x512xf32>, i32 -> vector<8x512xf32>
    %c2 = arith.constant 2 : index
    %c0_20 = arith.constant 0 : index
    %c0_21 = arith.constant 0 : index
    %37 = vector.load %arg4[%c2, %c0_20, %c0_21] : memref<9x8x1xf32, #tpu.memory_space<vmem>>, vector<1x8x1xf32>
    %38 = vector.shape_cast %37 : vector<1x8x1xf32> to vector<8x1xf32>
    %39 = vector.broadcast %38 : vector<8x1xf32> to vector<8x512xf32>
    %40 = arith.mulf %36, %39 : vector<8x512xf32>
    %c2_22 = arith.constant 2 : index
    %c0_23 = arith.constant 0 : index
    %c0_24 = arith.constant 0 : index
    %41 = vector.load %arg5[%c2_22, %c0_23, %c0_24] : memref<9x1x512xf32, #tpu.memory_space<vmem>>, vector<1x1x512xf32>
    %42 = vector.shape_cast %41 : vector<1x1x512xf32> to vector<1x512xf32>
    %43 = vector.broadcast %42 : vector<1x512xf32> to vector<8x512xf32>
    %44 = arith.mulf %40, %43 : vector<8x512xf32>
    %45 = arith.addf %35, %44 : vector<8x512xf32>
    %c1_i32 = arith.constant 1 : i32
    %46 = tpu.dynamic_rotate %12 by %c1_i32 dim 1 : vector<8x512xf32>, i32 -> vector<8x512xf32>
    %c3 = arith.constant 3 : index
    %c0_25 = arith.constant 0 : index
    %c0_26 = arith.constant 0 : index
    %47 = vector.load %arg4[%c3, %c0_25, %c0_26] : memref<9x8x1xf32, #tpu.memory_space<vmem>>, vector<1x8x1xf32>
    %48 = vector.shape_cast %47 : vector<1x8x1xf32> to vector<8x1xf32>
    %49 = vector.broadcast %48 : vector<8x1xf32> to vector<8x512xf32>
    %50 = arith.mulf %46, %49 : vector<8x512xf32>
    %c3_27 = arith.constant 3 : index
    %c0_28 = arith.constant 0 : index
    %c0_29 = arith.constant 0 : index
    %51 = vector.load %arg5[%c3_27, %c0_28, %c0_29] : memref<9x1x512xf32, #tpu.memory_space<vmem>>, vector<1x1x512xf32>
    %52 = vector.shape_cast %51 : vector<1x1x512xf32> to vector<1x512xf32>
    %53 = vector.broadcast %52 : vector<1x512xf32> to vector<8x512xf32>
    %54 = arith.mulf %50, %53 : vector<8x512xf32>
    %55 = arith.addf %45, %54 : vector<8x512xf32>
    %c4 = arith.constant 4 : index
    %c0_30 = arith.constant 0 : index
    %c0_31 = arith.constant 0 : index
    %56 = vector.load %arg4[%c4, %c0_30, %c0_31] : memref<9x8x1xf32, #tpu.memory_space<vmem>>, vector<1x8x1xf32>
    %57 = vector.shape_cast %56 : vector<1x8x1xf32> to vector<8x1xf32>
    %58 = vector.broadcast %57 : vector<8x1xf32> to vector<8x512xf32>
    %59 = arith.mulf %12, %58 : vector<8x512xf32>
    %60 = arith.addf %55, %59 : vector<8x512xf32>
    %c511_i32 = arith.constant 511 : i32
    %61 = tpu.dynamic_rotate %12 by %c511_i32 dim 1 : vector<8x512xf32>, i32 -> vector<8x512xf32>
    %c5 = arith.constant 5 : index
    %c0_32 = arith.constant 0 : index
    %c0_33 = arith.constant 0 : index
    %62 = vector.load %arg4[%c5, %c0_32, %c0_33] : memref<9x8x1xf32, #tpu.memory_space<vmem>>, vector<1x8x1xf32>
    %63 = vector.shape_cast %62 : vector<1x8x1xf32> to vector<8x1xf32>
    %64 = vector.broadcast %63 : vector<8x1xf32> to vector<8x512xf32>
    %65 = arith.mulf %61, %64 : vector<8x512xf32>
    %c5_34 = arith.constant 5 : index
    %c0_35 = arith.constant 0 : index
    %c0_36 = arith.constant 0 : index
    %66 = vector.load %arg5[%c5_34, %c0_35, %c0_36] : memref<9x1x512xf32, #tpu.memory_space<vmem>>, vector<1x1x512xf32>
    %67 = vector.shape_cast %66 : vector<1x1x512xf32> to vector<1x512xf32>
    %68 = vector.broadcast %67 : vector<1x512xf32> to vector<8x512xf32>
    %69 = arith.mulf %65, %68 : vector<8x512xf32>
    %70 = arith.addf %60, %69 : vector<8x512xf32>
    %c497_i32 = arith.constant 497 : i32
    %71 = tpu.dynamic_rotate %12 by %c497_i32 dim 1 : vector<8x512xf32>, i32 -> vector<8x512xf32>
    %c6 = arith.constant 6 : index
    %c0_37 = arith.constant 0 : index
    %c0_38 = arith.constant 0 : index
    %72 = vector.load %arg4[%c6, %c0_37, %c0_38] : memref<9x8x1xf32, #tpu.memory_space<vmem>>, vector<1x8x1xf32>
    %73 = vector.shape_cast %72 : vector<1x8x1xf32> to vector<8x1xf32>
    %74 = vector.broadcast %73 : vector<8x1xf32> to vector<8x512xf32>
    %75 = arith.mulf %71, %74 : vector<8x512xf32>
    %c6_39 = arith.constant 6 : index
    %c0_40 = arith.constant 0 : index
    %c0_41 = arith.constant 0 : index
    %76 = vector.load %arg5[%c6_39, %c0_40, %c0_41] : memref<9x1x512xf32, #tpu.memory_space<vmem>>, vector<1x1x512xf32>
    %77 = vector.shape_cast %76 : vector<1x1x512xf32> to vector<1x512xf32>
    %78 = vector.broadcast %77 : vector<1x512xf32> to vector<8x512xf32>
    %79 = arith.mulf %75, %78 : vector<8x512xf32>
    %80 = arith.addf %70, %79 : vector<8x512xf32>
    %c496_i32 = arith.constant 496 : i32
    %81 = tpu.dynamic_rotate %12 by %c496_i32 dim 1 : vector<8x512xf32>, i32 -> vector<8x512xf32>
    %c7 = arith.constant 7 : index
    %c0_42 = arith.constant 0 : index
    %c0_43 = arith.constant 0 : index
    %82 = vector.load %arg4[%c7, %c0_42, %c0_43] : memref<9x8x1xf32, #tpu.memory_space<vmem>>, vector<1x8x1xf32>
    %83 = vector.shape_cast %82 : vector<1x8x1xf32> to vector<8x1xf32>
    %84 = vector.broadcast %83 : vector<8x1xf32> to vector<8x512xf32>
    %85 = arith.mulf %81, %84 : vector<8x512xf32>
    %c7_44 = arith.constant 7 : index
    %c0_45 = arith.constant 0 : index
    %c0_46 = arith.constant 0 : index
    %86 = vector.load %arg5[%c7_44, %c0_45, %c0_46] : memref<9x1x512xf32, #tpu.memory_space<vmem>>, vector<1x1x512xf32>
    %87 = vector.shape_cast %86 : vector<1x1x512xf32> to vector<1x512xf32>
    %88 = vector.broadcast %87 : vector<1x512xf32> to vector<8x512xf32>
    %89 = arith.mulf %85, %88 : vector<8x512xf32>
    %90 = arith.addf %80, %89 : vector<8x512xf32>
    %c495_i32 = arith.constant 495 : i32
    %91 = tpu.dynamic_rotate %12 by %c495_i32 dim 1 : vector<8x512xf32>, i32 -> vector<8x512xf32>
    %c8 = arith.constant 8 : index
    %c0_47 = arith.constant 0 : index
    %c0_48 = arith.constant 0 : index
    %92 = vector.load %arg4[%c8, %c0_47, %c0_48] : memref<9x8x1xf32, #tpu.memory_space<vmem>>, vector<1x8x1xf32>
    %93 = vector.shape_cast %92 : vector<1x8x1xf32> to vector<8x1xf32>
    %94 = vector.broadcast %93 : vector<8x1xf32> to vector<8x512xf32>
    %95 = arith.mulf %91, %94 : vector<8x512xf32>
    %c8_49 = arith.constant 8 : index
    %c0_50 = arith.constant 0 : index
    %c0_51 = arith.constant 0 : index
    %96 = vector.load %arg5[%c8_49, %c0_50, %c0_51] : memref<9x1x512xf32, #tpu.memory_space<vmem>>, vector<1x1x512xf32>
    %97 = vector.shape_cast %96 : vector<1x1x512xf32> to vector<1x512xf32>
    %98 = vector.broadcast %97 : vector<1x512xf32> to vector<8x512xf32>
    %99 = arith.mulf %95, %98 : vector<8x512xf32>
    %100 = arith.addf %90, %99 : vector<8x512xf32>
    %c0_52 = arith.constant 0 : index
    %c0_53 = arith.constant 0 : index
    %101 = vector.load %arg7[%c0_52, %c0_53] : memref<8x8xf32, #tpu.memory_space<vmem>>, vector<8x8xf32>
    %cst_54 = arith.constant dense<0.000000e+00> : vector<8x512xf32>
    %102 = tpu.matmul %101, %100, %cst_54 {dimension_numbers = #tpu.dot_dimension_numbers<[1], [0], [0], [1], [0, 0, 1, 1], [], []>} : vector<8x8xf32>, vector<8x512xf32>, vector<8x512xf32> -> vector<8x512xf32>
    %c0_55 = arith.constant 0 : index
    %c0_56 = arith.constant 0 : index
    %103 = vector.load %arg8[%c0_55, %c0_56] : memref<8x1xf32, #tpu.memory_space<vmem>>, vector<8x1xf32>
    %104 = vector.broadcast %103 : vector<8x1xf32> to vector<8x512xf32>
    %105 = arith.addf %102, %104 : vector<8x512xf32>
    %cst_57 = arith.constant 0.000000e+00 : f32
    %106 = vector.broadcast %cst_57 : f32 to vector<8x512xf32>
    %107 = arith.subf %106, %105 : vector<8x512xf32>
    %108 = math.exp %107 : vector<8x512xf32>
    %cst_58 = arith.constant 1.000000e+00 : f32
    %109 = vector.broadcast %cst_58 : f32 to vector<8x512xf32>
    %110 = arith.addf %109, %108 : vector<8x512xf32>
    %111 = tpu.reciprocal %110 {approx = true} : vector<8x512xf32> -> vector<8x512xf32>
    %112 = arith.mulf %105, %111 : vector<8x512xf32>
    %c0_59 = arith.constant 0 : index
    %c0_60 = arith.constant 0 : index
    %113 = vector.load %arg9[%c0_59, %c0_60] : memref<8x512xf32, #tpu.memory_space<vmem>>, vector<8x512xf32>
    tpu.vector_store %arg9[%c0_59, %c0_60], %112 {strides = array<i32>} : memref<8x512xf32, #tpu.memory_space<vmem>>, vector<8x512xf32>,
    return
  }
  func.func @transform_0(%arg0: i32) -> (i32, i32) {
    %c0_i32 = arith.constant 0 : i32
    %c0_i32_0 = arith.constant 0 : i32
    return %c0_i32, %arg0 : i32, i32
  }
  func.func @transform_1(%arg0: i32) -> (i32, i32) {
    %c0_i32 = arith.constant 0 : i32
    %c0_i32_0 = arith.constant 0 : i32
    %c0_i32_1 = arith.constant 0 : i32
    return %c0_i32, %c0_i32_0 : i32, i32
  }
  func.func @transform_2(%arg0: i32) -> (i32, i32) {
    %c0_i32 = arith.constant 0 : i32
    %c0_i32_0 = arith.constant 0 : i32
    %c0_i32_1 = arith.constant 0 : i32
    return %c0_i32, %c0_i32_0 : i32, i32
  }
  func.func @transform_3(%arg0: i32) -> (i32, i32, i32) {
    %c0_i32 = arith.constant 0 : i32
    %c0_i32_0 = arith.constant 0 : i32
    %c0_i32_1 = arith.constant 0 : i32
    %c0_i32_2 = arith.constant 0 : i32
    return %c0_i32, %c0_i32_0, %c0_i32_1 : i32, i32, i32
  }
  func.func @transform_4(%arg0: i32) -> (i32, i32, i32) {
    %c0_i32 = arith.constant 0 : i32
    %c0_i32_0 = arith.constant 0 : i32
    %c0_i32_1 = arith.constant 0 : i32
    %c0_i32_2 = arith.constant 0 : i32
    return %c0_i32, %c0_i32_0, %c0_i32_1 : i32, i32, i32
  }
  func.func @transform_5(%arg0: i32) -> (i32, i32) {
    %c0_i32 = arith.constant 0 : i32
    %c0_i32_0 = arith.constant 0 : i32
    %c0_i32_1 = arith.constant 0 : i32
    return %c0_i32, %c0_i32_0 : i32, i32
  }
  func.func @transform_6(%arg0: i32) -> (i32, i32) {
    %c0_i32 = arith.constant 0 : i32
    %c0_i32_0 = arith.constant 0 : i32
    %c0_i32_1 = arith.constant 0 : i32
    return %c0_i32, %c0_i32_0 : i32, i32
  }
  func.func @transform_7(%arg0: i32) -> (i32, i32) {
    %c0_i32 = arith.constant 0 : i32
    %c0_i32_0 = arith.constant 0 : i32
    %c0_i32_1 = arith.constant 0 : i32
    return %c0_i32, %c0_i32_0 : i32, i32
  }
  func.func @transform_8(%arg0: i32) -> (i32, i32) {
    %c0_i32 = arith.constant 0 : i32
    %c0_i32_0 = arith.constant 0 : i32
    return %c0_i32, %arg0 : i32, i32
  }
}

</mosaic_0001>

<llo_original>
// kernel: tpu_custom_call.1
$region0: #{tpu_custom_call.1}
  #allocation0 [shape = 'u32[]', space=smem, size = 0x4, offset = 0x4, fixed_abs, tag = 'smem constant byte address 0x4 - core index']
  #allocation1 [shape = 'u32[72,128]{1,0:T(1,128)}', space=vmem, size = 0x9000, scoped, tag = 'internal scratch']
  %s0 = inlined_call_operand.vmem [shape: f32[4,512], index: 0, kind: input, shape index: {}]
  %s1 = inlined_call_operand.vmem [shape: f32[8,4], index: 1, kind: input, shape index: {}]
  %s2 = inlined_call_operand.vmem [shape: f32[8,1], index: 2, kind: input, shape index: {}]
  %s3 = inlined_call_operand.vmem [shape: f32[9,8,1], index: 3, kind: input, shape index: {}]
  %s4 = inlined_call_operand.vmem [shape: f32[9,1,512], index: 4, kind: input, shape index: {}]
  %s5 = inlined_call_operand.vmem [shape: f32[8,1], index: 5, kind: input, shape index: {}]
  %s6 = inlined_call_operand.vmem [shape: f32[8,8], index: 6, kind: input, shape index: {}]
  %s7 = inlined_call_operand.vmem [shape: f32[8,1], index: 7, kind: input, shape index: {}]
  %s8 = inlined_call_operand.hbm [shape: f32[8,512], index: 8, kind: output, shape index: {}]
  %s9 = sld [smem:[#allocation0]]
  $region42: #{tpu_custom_call.1} parent=0
    _
  %s11 = ssub.s32 1, %s9
  %s12 = scalar_select 0, %s11, %s9
  $region1: #{tpu_custom_call.1} parent=0
    #allocation2 [shape = 'u8[16384]{0}', space=vmem, size = 0x4000, scoped, tag = 'output window, operand 0, single buffered']
    #allocation3 [shape = 's32[1]{0}', space=sflag, size = 0x4, scoped, tag = 'scoped memory for tpu_custom_call.1']
    %13 = vsyncpa [#allocation3], 0
    // Predicated region
    $region2: #{tpu_custom_call.1} parent=1 // pred_check
      _
    $region3: #{tpu_custom_call.1} parent=1 // pred_check_branch
      %15 = sbr.rel (0) target = $region5
    $region4: #{tpu_custom_call.1} parent=1 // pred_region
      _
    $region5: #{tpu_custom_call.1} parent=1 // pred_fallthru
      _
    // Predicated region
    $region6: #{tpu_custom_call.1} parent=1 // pred_check
      _
    $region7: #{tpu_custom_call.1} parent=1 // pred_check_branch
      %17 = sbr.rel (0) target = $region9
    $region8: #{tpu_custom_call.1} parent=1 // pred_region
      _
    $region9: #{tpu_custom_call.1} parent=1 // pred_fallthru
      _
    // Predicated region
    $region10: #{tpu_custom_call.1} parent=1 // pred_check
      _
    $region11: #{tpu_custom_call.1} parent=1 // pred_check_branch
      %19 = sbr.rel (0) target = $region13
    $region12: #{tpu_custom_call.1} parent=1 // pred_region
      _
    $region13: #{tpu_custom_call.1} parent=1 // pred_fallthru
      _
    // Predicated region
    $region14: #{tpu_custom_call.1} parent=1 // pred_check
      _
    $region15: #{tpu_custom_call.1} parent=1 // pred_check_branch
      %21 = sbr.rel (0) target = $region17
    $region16: #{tpu_custom_call.1} parent=1 // pred_region
      _
    $region17: #{tpu_custom_call.1} parent=1 // pred_fallthru
      _
    // Predicated region
    $region18: #{tpu_custom_call.1} parent=1 // pred_check
      _
    $region19: #{tpu_custom_call.1} parent=1 // pred_check_branch
      %23 = sbr.rel (0) target = $region21
    $region20: #{tpu_custom_call.1} parent=1 // pred_region
      _
    $region21: #{tpu_custom_call.1} parent=1 // pred_fallthru
      _
    // Predicated region
    $region22: #{tpu_custom_call.1} parent=1 // pred_check
      _
    $region23: #{tpu_custom_call.1} parent=1 // pred_check_branch
      %25 = sbr.rel (0) target = $region25
    $region24: #{tpu_custom_call.1} parent=1 // pred_region
      _
    $region25: #{tpu_custom_call.1} parent=1 // pred_fallthru
      _
    // Predicated region
    $region26: #{tpu_custom_call.1} parent=1 // pred_check
      _
    $region27: #{tpu_custom_call.1} parent=1 // pred_check_branch
      %27 = sbr.rel (0) target = $region29
    $region28: #{tpu_custom_call.1} parent=1 // pred_region
      _
    $region29: #{tpu_custom_call.1} parent=1 // pred_fallthru
      _
    // Predicated region
    $region30: #{tpu_custom_call.1} parent=1 // pred_check
      _
    $region31: #{tpu_custom_call.1} parent=1 // pred_check_branch
      %29 = sbr.rel (0) target = $region33
    $region32: #{tpu_custom_call.1} parent=1 // pred_region
      _
    $region33: #{tpu_custom_call.1} parent=1 // pred_fallthru
      _
    %v30 = vld [vmem:[%s0] sm:$0xff]
    %v31 = vld [vmem:[%s0 + $0x8] sm:$0xff]
    %v32 = vld [vmem:[%s1] sm:$0xff]
    %v33 = vld [vmem:[%s2] sm:$0xff]
    %35 = vset.pattern.permute.xlu0 0
    %36 = vperm.xlu0 %35, %v33
    %v37 = vpop.permute.xlu0 %36
    %41 = vst [vmem:[#allocation1] ss:$2 sm:$0xff] %v30
    %s42 = scalar_lea.vmem [#allocation1], 16
    %43 = vst [vmem:[%s42] ss:$2 sm:$0xff] %v31
    %v44 = vld.sshfl [vmem:[#allocation1] sm:$0xff pattern:$0x75316420]
    %v45 = vld.sshfl [vmem:[#allocation1 + $0x8] sm:$0xff pattern:$0x75316420]
    %v46 = vld.sshfl [vmem:[#allocation1 + $0x10] sm:$0xff pattern:$0x75316420]
    %v47 = vld.sshfl [vmem:[#allocation1 + $0x18] sm:$0xff pattern:$0x75316420]
    %vm48 = vcmask 31744
    %v50 = vsel %vm48, %v32, 0
    %vm52 = vcmask 1043456
    %v53 = vsel %vm52, %v44, 0
    %v55 = vsel %vm52, %v45, 0
    %v57 = vsel %vm52, %v46, 0
    %v59 = vsel %vm52, %v47, 0
    %61 = vmatpush.msra.mxu0 0.0
    %62 = vmatpush.msra.mxu0 0.0
    %63 = vmatpush.msra.mxu0 0.0
    %64 = vmatpush.msra.mxu0 0.0
    %65 = vmatpush.msra.mxu0 0.0
    %66 = vmatpush.msra.mxu0 0.0
    %67 = vmatpush.msra.mxu0 0.0
    %68 = vmatpush.msra.mxu0 0.0
    %69 = vmatpush.msra.mxu0 0.0
    %70 = vmatpush.msra.mxu0 0.0
    %71 = vmatpush.msra.mxu0 0.0
    %72 = vmatpush.msra.mxu0 0.0
    %73 = vmatpush.msra.mxu0 0.0
    %74 = vmatpush.msra.mxu0 0.0
    %75 = vmatpush.msra.mxu0 0.0
    %76 = vmatpush.msra.mxu0 %v53
    %77 = vmatmul.f32.gmra.mxu0 %v50
    %v78 = vpop.f32.mrf.mxu0
    %v79 = vadd.f32 %v37, %v78
    %80 = vdwg.mxu0
    %81 = vmatpush.msra.mxu0 0.0
    %82 = vmatpush.msra.mxu0 0.0
    %83 = vmatpush.msra.mxu0 0.0
    %84 = vmatpush.msra.mxu0 0.0
    %85 = vmatpush.msra.mxu0 0.0
    %86 = vmatpush.msra.mxu0 0.0
    %87 = vmatpush.msra.mxu0 0.0
    %88 = vmatpush.msra.mxu0 0.0
    %89 = vmatpush.msra.mxu0 0.0
    %90 = vmatpush.msra.mxu0 0.0
    %91 = vmatpush.msra.mxu0 0.0
    %92 = vmatpush.msra.mxu0 0.0
    %93 = vmatpush.msra.mxu0 0.0
    %94 = vmatpush.msra.mxu0 0.0
    %95 = vmatpush.msra.mxu0 0.0
    %96 = vmatpush.msra.mxu0 %v55
    %97 = vmatmul.f32.gmra.mxu0 %v50
    %v98 = vpop.f32.mrf.mxu0
    %v99 = vadd.f32 %v37, %v98
    %100 = vdwg.mxu0
    %101 = vmatpush.msra.mxu0 0.0
    %102 = vmatpush.msra.mxu0 0.0
    %103 = vmatpush.msra.mxu0 0.0
    %104 = vmatpush.msra.mxu0 0.0
    %105 = vmatpush.msra.mxu0 0.0
    %106 = vmatpush.msra.mxu0 0.0
    %107 = vmatpush.msra.mxu0 0.0
    %108 = vmatpush.msra.mxu0 0.0
    %109 = vmatpush.msra.mxu0 0.0
    %110 = vmatpush.msra.mxu0 0.0
    %111 = vmatpush.msra.mxu0 0.0
    %112 = vmatpush.msra.mxu0 0.0
    %113 = vmatpush.msra.mxu0 0.0
    %114 = vmatpush.msra.mxu0 0.0
    %115 = vmatpush.msra.mxu0 0.0
    %116 = vmatpush.msra.mxu0 %v57
    %117 = vmatmul.f32.gmra.mxu0 %v50
    %v118 = vpop.f32.mrf.mxu0
    %v119 = vadd.f32 %v37, %v118
    %120 = vdwg.mxu0
    %121 = vmatpush.msra.mxu0 0.0
    %122 = vmatpush.msra.mxu0 0.0
    %123 = vmatpush.msra.mxu0 0.0
    %124 = vmatpush.msra.mxu0 0.0
    %125 = vmatpush.msra.mxu0 0.0
    %126 = vmatpush.msra.mxu0 0.0
    %127 = vmatpush.msra.mxu0 0.0
    %128 = vmatpush.msra.mxu0 0.0
    %129 = vmatpush.msra.mxu0 0.0
    %130 = vmatpush.msra.mxu0 0.0
    %131 = vmatpush.msra.mxu0 0.0
    %132 = vmatpush.msra.mxu0 0.0
    %133 = vmatpush.msra.mxu0 0.0
    %134 = vmatpush.msra.mxu0 0.0
    %135 = vmatpush.msra.mxu0 0.0
    %136 = vmatpush.msra.mxu0 %v59
    %137 = vmatmul.f32.gmra.mxu0 %v50
    %v138 = vpop.f32.mrf.mxu0
    %v139 = vadd.f32 %v37, %v138
    %140 = vdwg.mxu0
    %v141 = vsub.f32 0.0, %v79
    %v142 = vsub.f32 0.0, %v99
    %v143 = vsub.f32 0.0, %v119
    %v144 = vsub.f32 0.0, %v139
    %v145 = vmul.f32 %v141, 1.442695
    %v146 = vpow.pop %v145
    %v147 = vmul.f32 %v142, 1.442695
    %v148 = vpow.pop %v147
    %v149 = vmul.f32 %v143, 1.442695
    %v150 = vpow.pop %v149
    %v151 = vmul.f32 %v144, 1.442695
    %v152 = vpow.pop %v151
    %v153 = vadd.f32 %v146, 1.0
    %v154 = vadd.f32 %v148, 1.0
    %v155 = vadd.f32 %v150, 1.0
    %v156 = vadd.f32 %v152, 1.0
    %v157 = vrcp.pop %v153
    %v158 = vrcp.pop %v154
    %v159 = vrcp.pop %v155
    %v160 = vrcp.pop %v156
    %v161 = vmul.f32 %v79, %v157
    %v162 = vmul.f32 %v99, %v158
    %v163 = vmul.f32 %v119, %v159
    %v164 = vmul.f32 %v139, %v160
    %v165 = vld [vmem:[%s5] sm:$0xff]
    %167 = vset.pattern.permute.xlu0 0
    %168 = vperm.xlu0 %167, %v165
    %v169 = vpop.permute.xlu0 %168
    %171 = vrot.lane.b32.xlu0 %v161, 17
    %v172 = vpop.permute.xlu0 %171
    %173 = vrot.lane.b32.xlu0 %v162, 17
    %v174 = vpop.permute.xlu0 %173
    %175 = vrot.lane.b32.xlu0 %v163, 17
    %v176 = vpop.permute.xlu0 %175
    %177 = vrot.lane.b32.xlu0 %v164, 17
    %v178 = vpop.permute.xlu0 %177
    %v179 = vlaneseq
    %v180 = vand.u32 %v179, 127
    %vm181 = vcmp.lt.s32.totalorder %v180, 17
    %v182 = vsel %vm181, %v176, %v178
    %v183 = vsel %vm181, %v174, %v176
    %v184 = vsel %vm181, %v172, %v174
    %v185 = vsel %vm181, %v178, %v172
    %v186 = vld [vmem:[%s3] sm:$0xff]
    %188 = vset.pattern.permute.xlu0 0
    %189 = vperm.xlu0 %188, %v186
    %v190 = vpop.permute.xlu0 %189
    %v192 = vmul.f32 %v185, %v190
    %v193 = vmul.f32 %v184, %v190
    %v194 = vmul.f32 %v183, %v190
    %v195 = vmul.f32 %v182, %v190
    %v196 = vld [vmem:[%s4] sm:$0xf]
    %v198 = vperm.slane %v196, 0
    %v199 = vperm.slane %v196, 1
    %v200 = vperm.slane %v196, 2
    %v201 = vperm.slane %v196, 3
    %v206 = vmul.f32 %v192, %v198
    %v207 = vmul.f32 %v193, %v199
    %v208 = vmul.f32 %v194, %v200
    %v209 = vmul.f32 %v195, %v201
    %v210 = vadd.f32 %v169, %v206
    %v211 = vadd.f32 %v169, %v207
    %v212 = vadd.f32 %v169, %v208
    %v213 = vadd.f32 %v169, %v209
    %214 = vrot.lane.b32.xlu0 %v161, 16
    %v215 = vpop.permute.xlu0 %214
    %216 = vrot.lane.b32.xlu0 %v162, 16
    %v217 = vpop.permute.xlu0 %216
    %218 = vrot.lane.b32.xlu0 %v163, 16
    %v219 = vpop.permute.xlu0 %218
    %220 = vrot.lane.b32.xlu0 %v164, 16
    %v221 = vpop.permute.xlu0 %220
    %vm222 = vcmp.lt.s32.totalorder %v180, 16
    %v223 = vsel %vm222, %v219, %v221
    %v224 = vsel %vm222, %v217, %v219
    %v225 = vsel %vm222, %v215, %v217
    %v226 = vsel %vm222, %v221, %v215
    %s227 = scalar_lea.vmem %s3, 8
    %v228 = vld [vmem:[%s227] sm:$0xff]
    %230 = vset.pattern.permute.xlu0 0
    %231 = vperm.xlu0 %230, %v228
    %v232 = vpop.permute.xlu0 %231
    %v234 = vmul.f32 %v226, %v232
    %v235 = vmul.f32 %v225, %v232
    %v236 = vmul.f32 %v224, %v232
    %v237 = vmul.f32 %v223, %v232
    %s238 = scalar_lea.vmem %s4, 4
    %v239 = vld [vmem:[%s238] sm:$0xf]
    %v241 = vperm.slane %v239, 0
    %v242 = vperm.slane %v239, 1
    %v243 = vperm.slane %v239, 2
    %v244 = vperm.slane %v239, 3
    %v249 = vmul.f32 %v234, %v241
    %v250 = vmul.f32 %v235, %v242
    %v251 = vmul.f32 %v236, %v243
    %v252 = vmul.f32 %v237, %v244
    %v253 = vadd.f32 %v210, %v249
    %v254 = vadd.f32 %v211, %v250
    %v255 = vadd.f32 %v212, %v251
    %v256 = vadd.f32 %v213, %v252
    %257 = vrot.lane.b32.xlu0 %v161, 15
    %v258 = vpop.permute.xlu0 %257
    %259 = vrot.lane.b32.xlu0 %v162, 15
    %v260 = vpop.permute.xlu0 %259
    %261 = vrot.lane.b32.xlu0 %v163, 15
    %v262 = vpop.permute.xlu0 %261
    %263 = vrot.lane.b32.xlu0 %v164, 15
    %v264 = vpop.permute.xlu0 %263
    %vm265 = vcmp.lt.s32.totalorder %v180, 15
    %v266 = vsel %vm265, %v262, %v264
    %v267 = vsel %vm265, %v260, %v262
    %v268 = vsel %vm265, %v258, %v260
    %v269 = vsel %vm265, %v264, %v258
    %s270 = scalar_lea.vmem %s3, 16
    %v271 = vld [vmem:[%s270] sm:$0xff]
    %273 = vset.pattern.permute.xlu0 0
    %274 = vperm.xlu0 %273, %v271
    %v275 = vpop.permute.xlu0 %274
    %v277 = vmul.f32 %v269, %v275
    %v278 = vmul.f32 %v268, %v275
    %v279 = vmul.f32 %v267, %v275
    %v280 = vmul.f32 %v266, %v275
    %s281 = scalar_lea.vmem %s4, 8
    %v282 = vld [vmem:[%s281] sm:$0xf]
    %v284 = vperm.slane %v282, 0
    %v285 = vperm.slane %v282, 1
    %v286 = vperm.slane %v282, 2
    %v287 = vperm.slane %v282, 3
    %v292 = vmul.f32 %v277, %v284
    %v293 = vmul.f32 %v278, %v285
    %v294 = vmul.f32 %v279, %v286
    %v295 = vmul.f32 %v280, %v287
    %v296 = vadd.f32 %v253, %v292
    %v297 = vadd.f32 %v254, %v293
    %v298 = vadd.f32 %v255, %v294
    %v299 = vadd.f32 %v256, %v295
    %300 = vrot.lane.b32.xlu0 %v161, 1
    %v301 = vpop.permute.xlu0 %300
    %302 = vrot.lane.b32.xlu0 %v162, 1
    %v303 = vpop.permute.xlu0 %302
    %304 = vrot.lane.b32.xlu0 %v163, 1
    %v305 = vpop.permute.xlu0 %304
    %306 = vrot.lane.b32.xlu0 %v164, 1
    %v307 = vpop.permute.xlu0 %306
    %vm308 = vcmp.lt.s32.totalorder %v180, 1
    %v309 = vsel %vm308, %v305, %v307
    %v310 = vsel %vm308, %v303, %v305
    %v311 = vsel %vm308, %v301, %v303
    %v312 = vsel %vm308, %v307, %v301
    %s313 = scalar_lea.vmem %s3, 24
    %v314 = vld [vmem:[%s313] sm:$0xff]
    %316 = vset.pattern.permute.xlu0 0
    %317 = vperm.xlu0 %316, %v314
    %v318 = vpop.permute.xlu0 %317
    %v320 = vmul.f32 %v312, %v318
    %v321 = vmul.f32 %v311, %v318
    %v322 = vmul.f32 %v310, %v318
    %v323 = vmul.f32 %v309, %v318
    %s324 = scalar_lea.vmem %s4, 12
    %v325 = vld [vmem:[%s324] sm:$0xf]
    %v327 = vperm.slane %v325, 0
    %v328 = vperm.slane %v325, 1
    %v329 = vperm.slane %v325, 2
    %v330 = vperm.slane %v325, 3
    %v335 = vmul.f32 %v320, %v327
    %v336 = vmul.f32 %v321, %v328
    %v337 = vmul.f32 %v322, %v329
    %v338 = vmul.f32 %v323, %v330
    %v339 = vadd.f32 %v296, %v335
    %v340 = vadd.f32 %v297, %v336
    %v341 = vadd.f32 %v298, %v337
    %v342 = vadd.f32 %v299, %v338
    %s343 = scalar_lea.vmem %s3, 32
    %v344 = vld [vmem:[%s343] sm:$0xff]
    %346 = vset.pattern.permute.xlu0 0
    %347 = vperm.xlu0 %346, %v344
    %v348 = vpop.permute.xlu0 %347
    %v350 = vmul.f32 %v161, %v348
    %v351 = vmul.f32 %v162, %v348
    %v352 = vmul.f32 %v163, %v348
    %v353 = vmul.f32 %v164, %v348
    %v354 = vadd.f32 %v339, %v350
    %v355 = vadd.f32 %v340, %v351
    %v356 = vadd.f32 %v341, %v352
    %v357 = vadd.f32 %v342, %v353
    %358 = vrot.lane.b32.xlu0 %v161, 127
    %v359 = vpop.permute.xlu0 %358
    %360 = vrot.lane.b32.xlu0 %v162, 127
    %v361 = vpop.permute.xlu0 %360
    %362 = vrot.lane.b32.xlu0 %v163, 127
    %v363 = vpop.permute.xlu0 %362
    %364 = vrot.lane.b32.xlu0 %v164, 127
    %v365 = vpop.permute.xlu0 %364
    %vm366 = vcmp.lt.s32.totalorder %v180, 127
    %v367 = vsel %vm366, %v363, %v365
    %v368 = vsel %vm366, %v361, %v363
    %v369 = vsel %vm366, %v359, %v361
    %v370 = vsel %vm366, %v365, %v359
    %s371 = scalar_lea.vmem %s3, 40
    %v372 = vld [vmem:[%s371] sm:$0xff]
    %374 = vset.pattern.permute.xlu0 0
    %375 = vperm.xlu0 %374, %v372
    %v376 = vpop.permute.xlu0 %375
    %v378 = vmul.f32 %v369, %v376
    %v379 = vmul.f32 %v368, %v376
    %v380 = vmul.f32 %v367, %v376
    %v381 = vmul.f32 %v370, %v376
    %s382 = scalar_lea.vmem %s4, 20
    %v383 = vld [vmem:[%s382] sm:$0xf]
    %v385 = vperm.slane %v383, 0
    %v386 = vperm.slane %v383, 1
    %v387 = vperm.slane %v383, 2
    %v388 = vperm.slane %v383, 3
    %v393 = vmul.f32 %v378, %v385
    %v394 = vmul.f32 %v379, %v386
    %v395 = vmul.f32 %v380, %v387
    %v396 = vmul.f32 %v381, %v388
    %v397 = vadd.f32 %v354, %v393
    %v398 = vadd.f32 %v355, %v394
    %v399 = vadd.f32 %v356, %v395
    %v400 = vadd.f32 %v357, %v396
    %401 = vrot.lane.b32.xlu0 %v161, 113
    %v402 = vpop.permute.xlu0 %401
    %403 = vrot.lane.b32.xlu0 %v162, 113
    %v404 = vpop.permute.xlu0 %403
    %405 = vrot.lane.b32.xlu0 %v163, 113
    %v406 = vpop.permute.xlu0 %405
    %407 = vrot.lane.b32.xlu0 %v164, 113
    %v408 = vpop.permute.xlu0 %407
    %vm409 = vcmp.lt.s32.totalorder %v180, 113
    %v410 = vsel %vm409, %v406, %v408
    %v411 = vsel %vm409, %v404, %v406
    %v412 = vsel %vm409, %v402, %v404
    %v413 = vsel %vm409, %v408, %v402
    %s414 = scalar_lea.vmem %s3, 48
    %v415 = vld [vmem:[%s414] sm:$0xff]
    %417 = vset.pattern.permute.xlu0 0
    %418 = vperm.xlu0 %417, %v415
    %v419 = vpop.permute.xlu0 %418
    %v421 = vmul.f32 %v412, %v419
    %v422 = vmul.f32 %v411, %v419
    %v423 = vmul.f32 %v410, %v419
    %v424 = vmul.f32 %v413, %v419
    %s425 = scalar_lea.vmem %s4, 24
    %v426 = vld [vmem:[%s425] sm:$0xf]
    %v428 = vperm.slane %v426, 0
    %v429 = vperm.slane %v426, 1
    %v430 = vperm.slane %v426, 2
    %v431 = vperm.slane %v426, 3
    %v436 = vmul.f32 %v421, %v428
    %v437 = vmul.f32 %v422, %v429
    %v438 = vmul.f32 %v423, %v430
    %v439 = vmul.f32 %v424, %v431
    %v440 = vadd.f32 %v397, %v436
    %v441 = vadd.f32 %v398, %v437
    %v442 = vadd.f32 %v399, %v438
    %v443 = vadd.f32 %v400, %v439
    %444 = vrot.lane.b32.xlu0 %v161, 112
    %v445 = vpop.permute.xlu0 %444
    %446 = vrot.lane.b32.xlu0 %v162, 112
    %v447 = vpop.permute.xlu0 %446
    %448 = vrot.lane.b32.xlu0 %v163, 112
    %v449 = vpop.permute.xlu0 %448
    %450 = vrot.lane.b32.xlu0 %v164, 112
    %v451 = vpop.permute.xlu0 %450
    %vm452 = vcmp.lt.s32.totalorder %v180, 112
    %v453 = vsel %vm452, %v449, %v451
    %v454 = vsel %vm452, %v447, %v449
    %v455 = vsel %vm452, %v445, %v447
    %v456 = vsel %vm452, %v451, %v445
    %s457 = scalar_lea.vmem %s3, 56
    %v458 = vld [vmem:[%s457] sm:$0xff]
    %460 = vset.pattern.permute.xlu0 0
    %461 = vperm.xlu0 %460, %v458
    %v462 = vpop.permute.xlu0 %461
    %v464 = vmul.f32 %v455, %v462
    %v465 = vmul.f32 %v454, %v462
    %v466 = vmul.f32 %v453, %v462
    %v467 = vmul.f32 %v456, %v462
    %s468 = scalar_lea.vmem %s4, 28
    %v469 = vld [vmem:[%s468] sm:$0xf]
    %v471 = vperm.slane %v469, 0
    %v472 = vperm.slane %v469, 1
    %v473 = vperm.slane %v469, 2
    %v474 = vperm.slane %v469, 3
    %v479 = vmul.f32 %v464, %v471
    %v480 = vmul.f32 %v465, %v472
    %v481 = vmul.f32 %v466, %v473
    %v482 = vmul.f32 %v467, %v474
    %v483 = vadd.f32 %v440, %v479
    %v484 = vadd.f32 %v441, %v480
    %v485 = vadd.f32 %v442, %v481
    %v486 = vadd.f32 %v443, %v482
    %487 = vrot.lane.b32.xlu0 %v161, 111
    %v488 = vpop.permute.xlu0 %487
    %489 = vrot.lane.b32.xlu0 %v162, 111
    %v490 = vpop.permute.xlu0 %489
    %491 = vrot.lane.b32.xlu0 %v163, 111
    %v492 = vpop.permute.xlu0 %491
    %493 = vrot.lane.b32.xlu0 %v164, 111
    %v494 = vpop.permute.xlu0 %493
    %vm495 = vcmp.lt.s32.totalorder %v180, 111
    %v496 = vsel %vm495, %v492, %v494
    %v497 = vsel %vm495, %v490, %v492
    %v498 = vsel %vm495, %v488, %v490
    %v499 = vsel %vm495, %v494, %v488
    %s500 = scalar_lea.vmem %s3, 64
    %v501 = vld [vmem:[%s500] sm:$0xff]
    %503 = vset.pattern.permute.xlu0 0
    %504 = vperm.xlu0 %503, %v501
    %v505 = vpop.permute.xlu0 %504
    %v507 = vmul.f32 %v498, %v505
    %v508 = vmul.f32 %v497, %v505
    %v509 = vmul.f32 %v496, %v505
    %v510 = vmul.f32 %v499, %v505
    %s511 = scalar_lea.vmem %s4, 32
    %v512 = vld [vmem:[%s511] sm:$0xf]
    %v514 = vperm.slane %v512, 0
    %v515 = vperm.slane %v512, 1
    %v516 = vperm.slane %v512, 2
    %v517 = vperm.slane %v512, 3
    %v522 = vmul.f32 %v507, %v514
    %v523 = vmul.f32 %v508, %v515
    %v524 = vmul.f32 %v509, %v516
    %v525 = vmul.f32 %v510, %v517
    %v526 = vadd.f32 %v483, %v522
    %v527 = vadd.f32 %v484, %v523
    %v528 = vadd.f32 %v485, %v524
    %v529 = vadd.f32 %v486, %v525
    %v530 = vld [vmem:[%s6] sm:$0xff]
    %v531 = vld [vmem:[%s7] sm:$0xff]
    %533 = vset.pattern.permute.xlu0 0
    %534 = vperm.xlu0 %533, %v531
    %v535 = vpop.permute.xlu0 %534
    %vm537 = vcmask 64512
    %v539 = vsel %vm537, %v530, 0
    %541 = vmatpush.msra.mxu0 0.0
    %542 = vmatpush.msra.mxu0 0.0
    %543 = vmatpush.msra.mxu0 0.0
    %544 = vmatpush.msra.mxu0 0.0
    %545 = vmatpush.msra.mxu0 0.0
    %546 = vmatpush.msra.mxu0 0.0
    %547 = vmatpush.msra.mxu0 0.0
    %548 = vmatpush.msra.mxu0 0.0
    %549 = vmatpush.msra.mxu0 0.0
    %550 = vmatpush.msra.mxu0 0.0
    %551 = vmatpush.msra.mxu0 0.0
    %552 = vmatpush.msra.mxu0 0.0
    %553 = vmatpush.msra.mxu0 0.0
    %554 = vmatpush.msra.mxu0 0.0
    %555 = vmatpush.msra.mxu0 0.0
    %556 = vmatpush.msra.mxu0 %v526
    %557 = vmatmul.f32.gmra.mxu0 %v539
    %v558 = vpop.f32.mrf.mxu0
    %v559 = vadd.f32 %v535, %v558
    %560 = vdwg.mxu0
    %561 = vmatpush.msra.mxu0 0.0
    %562 = vmatpush.msra.mxu0 0.0
    %563 = vmatpush.msra.mxu0 0.0
    %564 = vmatpush.msra.mxu0 0.0
    %565 = vmatpush.msra.mxu0 0.0
    %566 = vmatpush.msra.mxu0 0.0
    %567 = vmatpush.msra.mxu0 0.0
    %568 = vmatpush.msra.mxu0 0.0
    %569 = vmatpush.msra.mxu0 0.0
    %570 = vmatpush.msra.mxu0 0.0
    %571 = vmatpush.msra.mxu0 0.0
    %572 = vmatpush.msra.mxu0 0.0
    %573 = vmatpush.msra.mxu0 0.0
    %574 = vmatpush.msra.mxu0 0.0
    %575 = vmatpush.msra.mxu0 0.0
    %576 = vmatpush.msra.mxu0 %v527
    %577 = vmatmul.f32.gmra.mxu0 %v539
    %v578 = vpop.f32.mrf.mxu0
    %v579 = vadd.f32 %v535, %v578
    %580 = vdwg.mxu0
    %581 = vmatpush.msra.mxu0 0.0
    %582 = vmatpush.msra.mxu0 0.0
    %583 = vmatpush.msra.mxu0 0.0
    %584 = vmatpush.msra.mxu0 0.0
    %585 = vmatpush.msra.mxu0 0.0
    %586 = vmatpush.msra.mxu0 0.0
    %587 = vmatpush.msra.mxu0 0.0
    %588 = vmatpush.msra.mxu0 0.0
    %589 = vmatpush.msra.mxu0 0.0
    %590 = vmatpush.msra.mxu0 0.0
    %591 = vmatpush.msra.mxu0 0.0
    %592 = vmatpush.msra.mxu0 0.0
    %593 = vmatpush.msra.mxu0 0.0
    %594 = vmatpush.msra.mxu0 0.0
    %595 = vmatpush.msra.mxu0 0.0
    %596 = vmatpush.msra.mxu0 %v528
    %597 = vmatmul.f32.gmra.mxu0 %v539
    %v598 = vpop.f32.mrf.mxu0
    %v599 = vadd.f32 %v535, %v598
    %600 = vdwg.mxu0
    %601 = vmatpush.msra.mxu0 0.0
    %602 = vmatpush.msra.mxu0 0.0
    %603 = vmatpush.msra.mxu0 0.0
    %604 = vmatpush.msra.mxu0 0.0
    %605 = vmatpush.msra.mxu0 0.0
    %606 = vmatpush.msra.mxu0 0.0
    %607 = vmatpush.msra.mxu0 0.0
    %608 = vmatpush.msra.mxu0 0.0
    %609 = vmatpush.msra.mxu0 0.0
    %610 = vmatpush.msra.mxu0 0.0
    %611 = vmatpush.msra.mxu0 0.0
    %612 = vmatpush.msra.mxu0 0.0
    %613 = vmatpush.msra.mxu0 0.0
    %614 = vmatpush.msra.mxu0 0.0
    %615 = vmatpush.msra.mxu0 0.0
    %616 = vmatpush.msra.mxu0 %v529
    %617 = vmatmul.f32.gmra.mxu0 %v539
    %v618 = vpop.f32.mrf.mxu0
    %v619 = vadd.f32 %v535, %v618
    %620 = vdwg.mxu0
    %v621 = vsub.f32 0.0, %v559
    %v622 = vsub.f32 0.0, %v579
    %v623 = vsub.f32 0.0, %v599
    %v624 = vsub.f32 0.0, %v619
    %v625 = vmul.f32 %v621, 1.442695
    %v626 = vpow.pop %v625
    %v627 = vmul.f32 %v622, 1.442695
    %v628 = vpow.pop %v627
    %v629 = vmul.f32 %v623, 1.442695
    %v630 = vpow.pop %v629
    %v631 = vmul.f32 %v624, 1.442695
    %v632 = vpow.pop %v631
    %v633 = vadd.f32 %v626, 1.0
    %v634 = vadd.f32 %v628, 1.0
    %v635 = vadd.f32 %v630, 1.0
    %v636 = vadd.f32 %v632, 1.0
    %v637 = vrcp.pop %v633
    %v638 = vrcp.pop %v634
    %v639 = vrcp.pop %v635
    %v640 = vrcp.pop %v636
    %v641 = vmul.f32 %v559, %v637
    %v642 = vmul.f32 %v579, %v638
    %v643 = vmul.f32 %v599, %v639
    %v644 = vmul.f32 %v619, %v640
    %645 = vst [vmem:[#allocation2] sm:$0xff] %v641
    %646 = vst [vmem:[#allocation2 + $0x8] sm:$0xff] %v642
    %647 = vst [vmem:[#allocation2 + $0x10] sm:$0xff] %v643
    %648 = vst [vmem:[#allocation2 + $0x18] sm:$0xff] %v644
    // Predicated region
    $region34: #{tpu_custom_call.1} parent=1 // pred_check
      _
    $region35: #{tpu_custom_call.1} parent=1 // pred_check_branch
      %650 = sbr.rel (0) target = $region37
    $region36: #{tpu_custom_call.1} parent=1 // pred_region
      %652 = vsyncadd [#allocation3], 0
      %s654 = sshll.u32 [#allocation2], 4
      %s655 = int_to_ptr.vmem [resolvable:$true] %s654
      %s656 = sshll.u32 %s8, 4
      %s657 = int_to_ptr.hbm [resolvable:$true] %s656
      %659 = dma.vmem_to_hbm [thread:$0]  %s655, 512, %s657, [#allocation3]
    $region37: #{tpu_custom_call.1} parent=1 // pred_fallthru
      _
    // Predicated region
    $region38: #{tpu_custom_call.1} parent=1 // pred_check
      _
    $region39: #{tpu_custom_call.1} parent=1 // pred_check_branch
      %661 = sbr.rel (0) target = $region41
    $region40: #{tpu_custom_call.1} parent=1 // pred_region
      %663 = dma.done [#allocation3], 512
    $region41: #{tpu_custom_call.1} parent=1 // pred_fallthru
      _
    %664 = vsyncpa [#allocation3], 1

</llo_original>
